<compile_context>
chip_gen: v7x
topology: tpu7x:2x2x1
jax: 0.10.0
libtpu: 0.0.40
codegen_flags: <defaults>
</compile_context>

<pallas_src>
import jax
import jax.numpy as jnp
from jax.experimental import pallas as pl
from jax.experimental.pallas import tpu as pltpu


def _round_up(x, m):
    return ((x + m - 1) // m) * m


def varembed_kernel(xjm_ref, w1_ref, b1_ref, w2_ref, b2_ref, out_ref):
    # xjm_ref: [TILE_M, F_tot]  columns = [x, aux..., mask]
    # w1_ref : [F_tot, 4E], b1_ref: [1, 4E]
    # w2_ref : [4E, 2E],    b2_ref: [1, 2E]
    # out_ref: [TILE_M, E]
    xjm = xjm_ref[...]

    # Stage 1, both branches fused: one 128-lane-wide MXU pass + bias + relu.
    # (The mask / missing-branch columns hit exact-zero weight rows.)
    h = jnp.dot(xjm, w1_ref[...], preferred_element_type=jnp.float32) + b1_ref[...]
    h = jnp.maximum(h, 0.0)                                    # [TILE_M, 4E]

    # Stage 2, block-diagonal weights: r = [r_O | r_M].
    r = jnp.dot(h, w2_ref[...], preferred_element_type=jnp.float32) + b2_ref[...]

    e = out_ref.shape[-1]
    mask = xjm[:, -1:]                                         # [TILE_M, 1], {0,1}
    # r_O * mask + r_M * ~mask  ==  select(mask, r_O, r_M) for a {0,1} mask.
    out_ref[...] = jnp.where(mask != 0.0, r[:, :e], r[:, e:])


def var_embed(x, aux, mask_O, params, tile_m=2048):
    """x: [B, 1, T], aux: [B, Faux, T], mask_O: [B, 1, T] bool -> [B, T, E] f32."""
    B, _, T = x.shape
    Faux = aux.shape[1]
    E = params["w_o"].shape[1]
    F_in = 1 + Faux               # features seen by the O branch
    F_tot = F_in + 1              # + mask column
    f32 = jnp.float32

    # ---- one-time weight packing (fuse the O and M branches) ----
    # W1 columns [0:2E] -> branch O (uses x + aux); [2E:4E] -> branch M (aux only).
    w1 = jnp.zeros((F_tot, 4 * E), f32)
    w1 = w1.at[:F_in, : 2 * E].set(params["w_pre_o"].astype(f32))
    w1 = w1.at[1:F_in, 2 * E:].set(params["w_pre_m"].astype(f32))
    b1 = jnp.concatenate([params["b_pre_o"], params["b_pre_m"]], axis=1).astype(f32)

    w2 = jnp.zeros((4 * E, 2 * E), f32)
    w2 = w2.at[: 2 * E, :E].set(params["w_o"].astype(f32))
    w2 = w2.at[2 * E:, E:].set(params["w_m"].astype(f32))
    b2 = jnp.concatenate([params["b_o"], params["b_m"]], axis=1).astype(f32)

    # ---- pack x, aux, mask into one row-major [M, F_tot] stream ----
    xjm = jnp.concatenate([x.astype(f32), aux.astype(f32), mask_O.astype(f32)],
                          axis=1)                                  # [B, F_tot, T]
    xjm_rows = jnp.transpose(xjm, (0, 2, 1)).reshape(B * T, F_tot)

    M = B * T
    if M <= tile_m:
        tile_m = _round_up(M, 8)          # small-problem path: single grid step
    m_pad = _round_up(M, tile_m)
    if m_pad != M:
        xjm_rows = jnp.pad(xjm_rows, ((0, m_pad - M), (0, 0)))

    grid = (m_pad // tile_m,)

    out = pl.pallas_call(
        varembed_kernel,
        out_shape=jax.ShapeDtypeStruct((m_pad, E), f32),
        grid=grid,
        in_specs=[
            pl.BlockSpec((tile_m, F_tot), lambda i: (i, 0)),       # packed rows
            # Constant index_maps -> weights stay VMEM-resident across the grid.
            pl.BlockSpec(w1.shape, lambda i: (0, 0)),
            pl.BlockSpec(b1.shape, lambda i: (0, 0)),
            pl.BlockSpec(w2.shape, lambda i: (0, 0)),
            pl.BlockSpec(b2.shape, lambda i: (0, 0)),
        ],
        out_specs=pl.BlockSpec((tile_m, E), lambda i: (i, 0)),
        compiler_params=pltpu.CompilerParams(
            dimension_semantics=("parallel",)),
    )(xjm_rows, w1, b1, w2, b2)

    return out[:M].reshape(B, T, E)


def var_embed_reference(x, aux, mask_O, p):
    """Plain-JAX mirror of the PyTorch forward (for correctness check)."""
    xj = jnp.concatenate([x, aux], axis=1)
    xj_t = jnp.transpose(xj, (0, 2, 1))
    aux_t = jnp.transpose(aux, (0, 2, 1))
    m = jnp.transpose(mask_O, (0, 2, 1)).astype(jnp.float32)
    r_o = jnp.maximum(xj_t @ p["w_pre_o"] + p["b_pre_o"][0], 0.0) @ p["w_o"] + p["b_o"][0]
    r_m = jnp.maximum(aux_t @ p["w_pre_m"] + p["b_pre_m"][0], 0.0) @ p["w_m"] + p["b_m"][0]
    return m * r_o + (1.0 - m) * r_m


if __name__ == "__main__":
    # Small shapes consistent with the module: cfg.features_aux=4, cfg.embed_v=32
    B, T, Faux, E = 2, 16, 4, 32

    key = jax.random.PRNGKey(0)
    ks = jax.random.split(key, 12)

    # Deterministic synthetic parameters; weights stored as [in, out]
    # (equivalent to PyTorch Linear weight.T), biases stored as [1, out].
    params = {
        "w_pre_o": 0.1 * jax.random.normal(ks[0], (1 + Faux, 2 * E), jnp.float32),
        "b_pre_o": 0.1 * jax.random.normal(ks[1], (1, 2 * E), jnp.float32),
        "w_pre_m": 0.1 * jax.random.normal(ks[2], (Faux, 2 * E), jnp.float32),
        "b_pre_m": 0.1 * jax.random.normal(ks[3], (1, 2 * E), jnp.float32),
        "w_o":     0.1 * jax.random.normal(ks[4], (2 * E, E), jnp.float32),
        "b_o":     0.1 * jax.random.normal(ks[5], (1, E), jnp.float32),
        "w_m":     0.1 * jax.random.normal(ks[6], (2 * E, E), jnp.float32),
        "b_m":     0.1 * jax.random.normal(ks[7], (1, E), jnp.float32),
    }

    x = jax.random.normal(ks[8], (B, 1, T), jnp.float32)
    aux = jax.random.normal(ks[9], (B, Faux, T), jnp.float32)
    mask_O = jax.random.bernoulli(ks[10], 0.5, (B, 1, T))

    out = jax.block_until_ready(var_embed(x, aux, mask_O, params))

    expected = var_embed_reference(x, aux, mask_O, params)
    assert out.shape == (B, T, E)
    assert jnp.allclose(out, expected, atol=1e-5, rtol=1e-5), "mismatch vs reference"

    print("KERNEL_OK")
</pallas_src>

<mosaic_0001>
module attributes {stable_mosaic.version = 11 : i64} {
  func.func @varembed_kernel(%arg0: i32, %arg1: memref<32x6xf32, #tpu.memory_space<vmem>>, %arg2: memref<6x128xf32, #tpu.memory_space<vmem>>, %arg3: memref<1x128xf32, #tpu.memory_space<vmem>>, %arg4: memref<128x64xf32, #tpu.memory_space<vmem>>, %arg5: memref<1x64xf32, #tpu.memory_space<vmem>>, %arg6: memref<32x32xf32, #tpu.memory_space<vmem>>) attributes {dimension_semantics = [#tpu.dimension_semantics<parallel>], iteration_bounds = array<i64: 1>, scalar_prefetch = 0 : i64, scratch_operands = 0 : i64, tpu.core_type = #tpu.core_type<tc>, window_params = [{transform_indices = @transform_0, window_bounds = array<i64: 32, 6>}, {pipeline_mode = #tpu.pipeline_mode<synchronous>, transform_indices = @transform_1, window_bounds = array<i64: 6, 128>}, {pipeline_mode = #tpu.pipeline_mode<synchronous>, transform_indices = @transform_2, window_bounds = array<i64: 1, 128>}, {pipeline_mode = #tpu.pipeline_mode<synchronous>, transform_indices = @transform_3, window_bounds = array<i64: 128, 64>}, {pipeline_mode = #tpu.pipeline_mode<synchronous>, transform_indices = @transform_4, window_bounds = array<i64: 1, 64>}, {transform_indices = @transform_5, window_bounds = array<i64: 32, 32>}]} {
    %c0 = arith.constant 0 : index
    %c0_0 = arith.constant 0 : index
    %0 = vector.load %arg1[%c0, %c0_0] : memref<32x6xf32, #tpu.memory_space<vmem>>, vector<32x6xf32>
    %c0_1 = arith.constant 0 : index
    %c0_2 = arith.constant 0 : index
    %1 = vector.load %arg2[%c0_1, %c0_2] : memref<6x128xf32, #tpu.memory_space<vmem>>, vector<6x128xf32>
    %cst = arith.constant dense<0.000000e+00> : vector<32x128xf32>
    %2 = tpu.matmul %0, %1, %cst {dimension_numbers = #tpu.dot_dimension_numbers<[1], [0], [0], [1], [0, 0, 1, 1], [], []>} : vector<32x6xf32>, vector<6x128xf32>, vector<32x128xf32> -> vector<32x128xf32>
    %c0_3 = arith.constant 0 : index
    %c0_4 = arith.constant 0 : index
    %3 = vector.load %arg3[%c0_3, %c0_4] : memref<1x128xf32, #tpu.memory_space<vmem>>, vector<1x128xf32>
    %4 = vector.broadcast %3 : vector<1x128xf32> to vector<32x128xf32>
    %5 = arith.addf %2, %4 : vector<32x128xf32>
    %cst_5 = arith.constant 0.000000e+00 : f32
    %6 = vector.broadcast %cst_5 : f32 to vector<32x128xf32>
    %7 = arith.maximumf %5, %6 : vector<32x128xf32>
    %c0_6 = arith.constant 0 : index
    %c0_7 = arith.constant 0 : index
    %8 = vector.load %arg4[%c0_6, %c0_7] : memref<128x64xf32, #tpu.memory_space<vmem>>, vector<128x64xf32>
    %cst_8 = arith.constant dense<0.000000e+00> : vector<32x64xf32>
    %9 = tpu.matmul %7, %8, %cst_8 {dimension_numbers = #tpu.dot_dimension_numbers<[1], [0], [0], [1], [0, 0, 1, 1], [], []>} : vector<32x128xf32>, vector<128x64xf32>, vector<32x64xf32> -> vector<32x64xf32>
    %c0_9 = arith.constant 0 : index
    %c0_10 = arith.constant 0 : index
    %10 = vector.load %arg5[%c0_9, %c0_10] : memref<1x64xf32, #tpu.memory_space<vmem>>, vector<1x64xf32>
    %11 = vector.broadcast %10 : vector<1x64xf32> to vector<32x64xf32>
    %12 = arith.addf %9, %11 : vector<32x64xf32>
    %13 = vector.extract_strided_slice %0 {offsets = [0, 5], sizes = [32, 1], strides = [1, 1]} : vector<32x6xf32> to vector<32x1xf32>
    %cst_11 = arith.constant 0.000000e+00 : f32
    %14 = vector.broadcast %cst_11 : f32 to vector<32x1xf32>
    %15 = arith.cmpf one, %13, %14 : vector<32x1xf32>
    %16 = vector.extract_strided_slice %12 {offsets = [0, 0], sizes = [32, 32], strides = [1, 1]} : vector<32x64xf32> to vector<32x32xf32>
    %17 = vector.extract_strided_slice %12 {offsets = [0, 32], sizes = [32, 32], strides = [1, 1]} : vector<32x64xf32> to vector<32x32xf32>
    %18 = vector.shape_cast %15 : vector<32x1xi1> to vector<32x1xi1>
    %19 = vector.broadcast %18 : vector<32x1xi1> to vector<32x32xi1>
    %20 = arith.select %19, %16, %17 : vector<32x32xi1>, vector<32x32xf32>
    %c0_12 = arith.constant 0 : index
    %c0_13 = arith.constant 0 : index
    %21 = vector.load %arg6[%c0_12, %c0_13] : memref<32x32xf32, #tpu.memory_space<vmem>>, vector<32x32xf32>
    tpu.vector_store %arg6[%c0_12, %c0_13], %20 {strides = array<i32>} : memref<32x32xf32, #tpu.memory_space<vmem>>, vector<32x32xf32>,
    return
  }
  func.func @transform_0(%arg0: i32) -> (i32, i32) {
    %c0_i32 = arith.constant 0 : i32
    %c0_i32_0 = arith.constant 0 : i32
    return %arg0, %c0_i32 : i32, i32
  }
  func.func @transform_1(%arg0: i32) -> (i32, i32) {
    %c0_i32 = arith.constant 0 : i32
    %c0_i32_0 = arith.constant 0 : i32
    %c0_i32_1 = arith.constant 0 : i32
    return %c0_i32, %c0_i32_0 : i32, i32
  }
  func.func @transform_2(%arg0: i32) -> (i32, i32) {
    %c0_i32 = arith.constant 0 : i32
    %c0_i32_0 = arith.constant 0 : i32
    %c0_i32_1 = arith.constant 0 : i32
    return %c0_i32, %c0_i32_0 : i32, i32
  }
  func.func @transform_3(%arg0: i32) -> (i32, i32) {
    %c0_i32 = arith.constant 0 : i32
    %c0_i32_0 = arith.constant 0 : i32
    %c0_i32_1 = arith.constant 0 : i32
    return %c0_i32, %c0_i32_0 : i32, i32
  }
  func.func @transform_4(%arg0: i32) -> (i32, i32) {
    %c0_i32 = arith.constant 0 : i32
    %c0_i32_0 = arith.constant 0 : i32
    %c0_i32_1 = arith.constant 0 : i32
    return %c0_i32, %c0_i32_0 : i32, i32
  }
  func.func @transform_5(%arg0: i32) -> (i32, i32) {
    %c0_i32 = arith.constant 0 : i32
    %c0_i32_0 = arith.constant 0 : i32
    return %arg0, %c0_i32 : i32, i32
  }
}

</mosaic_0001>

<llo_original>
// kernel: tpu_custom_call.1
$region0: #{tpu_custom_call.1}
  #allocation0 [shape = 'u32[]', space=smem, size = 0x4, offset = 0x4, fixed_abs, tag = 'smem constant byte address 0x4 - core index']
  #allocation1 [shape = 'u32[144,128]{1,0:T(1,128)}', space=vmem, size = 0x12000, scoped, tag = 'internal scratch']
  %s0 = inlined_call_operand.vmem [shape: f32[32,6], index: 0, kind: input, shape index: {}]
  %s1 = inlined_call_operand.vmem [shape: f32[6,128], index: 1, kind: input, shape index: {}]
  %s2 = inlined_call_operand.vmem [shape: f32[1,128], index: 2, kind: input, shape index: {}]
  %s3 = inlined_call_operand.vmem [shape: f32[128,64], index: 3, kind: input, shape index: {}]
  %s4 = inlined_call_operand.vmem [shape: f32[1,64], index: 4, kind: input, shape index: {}]
  %s5 = inlined_call_operand.hbm [shape: f32[32,32], index: 5, kind: output, shape index: {}]
  %s6 = sld [smem:[#allocation0]]
  $region30: #{tpu_custom_call.1} parent=0
    _
  %s8 = ssub.s32 1, %s6
  %s9 = scalar_select 0, %s8, %s6
  $region1: #{tpu_custom_call.1} parent=0
    #allocation2 [shape = 'u8[16384]{0}', space=vmem, size = 0x4000, scoped, tag = 'output window, operand 0, single buffered']
    #allocation3 [shape = 's32[1]{0}', space=sflag, size = 0x4, scoped, tag = 'scoped memory for tpu_custom_call.1']
    %10 = vsyncpa [#allocation3], 0
    // Predicated region
    $region2: #{tpu_custom_call.1} parent=1 // pred_check
      _
    $region3: #{tpu_custom_call.1} parent=1 // pred_check_branch
      %12 = sbr.rel (0) target = $region5
    $region4: #{tpu_custom_call.1} parent=1 // pred_region
      _
    $region5: #{tpu_custom_call.1} parent=1 // pred_fallthru
      _
    // Predicated region
    $region6: #{tpu_custom_call.1} parent=1 // pred_check
      _
    $region7: #{tpu_custom_call.1} parent=1 // pred_check_branch
      %14 = sbr.rel (0) target = $region9
    $region8: #{tpu_custom_call.1} parent=1 // pred_region
      _
    $region9: #{tpu_custom_call.1} parent=1 // pred_fallthru
      _
    // Predicated region
    $region10: #{tpu_custom_call.1} parent=1 // pred_check
      _
    $region11: #{tpu_custom_call.1} parent=1 // pred_check_branch
      %16 = sbr.rel (0) target = $region13
    $region12: #{tpu_custom_call.1} parent=1 // pred_region
      _
    $region13: #{tpu_custom_call.1} parent=1 // pred_fallthru
      _
    // Predicated region
    $region14: #{tpu_custom_call.1} parent=1 // pred_check
      _
    $region15: #{tpu_custom_call.1} parent=1 // pred_check_branch
      %18 = sbr.rel (0) target = $region17
    $region16: #{tpu_custom_call.1} parent=1 // pred_region
      _
    $region17: #{tpu_custom_call.1} parent=1 // pred_fallthru
      _
    // Predicated region
    $region18: #{tpu_custom_call.1} parent=1 // pred_check
      _
    $region19: #{tpu_custom_call.1} parent=1 // pred_check_branch
      %20 = sbr.rel (0) target = $region21
    $region20: #{tpu_custom_call.1} parent=1 // pred_region
      _
    $region21: #{tpu_custom_call.1} parent=1 // pred_fallthru
      _
    %v21 = vld [vmem:[%s0] sm:$0xff]
    %v22 = vld [vmem:[%s0 + $0x8] sm:$0xff]
    %v23 = vld [vmem:[%s0 + $0x10] sm:$0xff]
    %v24 = vld [vmem:[%s0 + $0x18] sm:$0xff]
    %v25 = vld [vmem:[%s1] sm:$0x3f]
    %v26 = vld [vmem:[%s2] sm:$0x1]
    %v28 = vlaneseq
    %v29 = vshrl.u32 %v28, 7
    %v30 = vsub.s32 0, %v29
    %v31 = vrot.slane %v26, %v30
    %vm33 = vcmask 48128
    %v35 = vsel %vm33, %v21, 0
    %v38 = vsel %vm33, %v22, 0
    %v41 = vsel %vm33, %v23, 0
    %v44 = vsel %vm33, %v24, 0
    %vm46 = vcmask 1045504
    %v48 = vsel %vm46, %v25, 0
    %50 = vmatprep.subr.mxu0 0.0
    %51 = vmatpush1.msra.mxu0 %v48
    %52 = vmatprep.subr.mxu0 0.0
    %53 = vmatpush1.msra.mxu0 0.0
    %54 = vmatprep.subr.mxu0 0.0
    %55 = vmatpush1.msra.mxu0 0.0
    %56 = vmatprep.subr.mxu0 0.0
    %57 = vmatpush1.msra.mxu0 0.0
    %58 = vmatprep.subr.mxu0 0.0
    %59 = vmatpush1.msra.mxu0 0.0
    %60 = vmatprep.subr.mxu0 0.0
    %61 = vmatpush1.msra.mxu0 0.0
    %62 = vmatprep.subr.mxu0 0.0
    %63 = vmatpush1.msra.mxu0 0.0
    %64 = vmatprep.subr.mxu0 0.0
    %65 = vmatpush1.msra.mxu0 0.0
    %66 = vmatprep.subr.mxu0 0.0
    %67 = vmatpush1.msra.mxu0 0.0
    %68 = vmatprep.subr.mxu0 0.0
    %69 = vmatpush1.msra.mxu0 0.0
    %70 = vmatprep.subr.mxu0 0.0
    %71 = vmatpush1.msra.mxu0 0.0
    %72 = vmatprep.subr.mxu0 0.0
    %73 = vmatpush1.msra.mxu0 0.0
    %74 = vmatprep.subr.mxu0 0.0
    %75 = vmatpush1.msra.mxu0 0.0
    %76 = vmatprep.subr.mxu0 0.0
    %77 = vmatpush1.msra.mxu0 0.0
    %78 = vmatprep.subr.mxu0 0.0
    %79 = vmatpush1.msra.mxu0 0.0
    %80 = vmatprep.subr.mxu0 0.0
    %81 = vmatpush1.msra.mxu0 0.0
    %82 = vmatprep.subr.mxu0 0.0
    %83 = vmatpush1.msra.mxu0 0.0
    %84 = vmatprep.subr.mxu0 0.0
    %85 = vmatpush1.msra.mxu0 0.0
    %86 = vmatprep.subr.mxu0 0.0
    %87 = vmatpush1.msra.mxu0 0.0
    %88 = vmatprep.subr.mxu0 0.0
    %89 = vmatpush1.msra.mxu0 0.0
    %90 = vmatprep.subr.mxu0 0.0
    %91 = vmatpush1.msra.mxu0 0.0
    %92 = vmatprep.subr.mxu0 0.0
    %93 = vmatpush1.msra.mxu0 0.0
    %94 = vmatprep.subr.mxu0 0.0
    %95 = vmatpush1.msra.mxu0 0.0
    %96 = vmatprep.subr.mxu0 0.0
    %97 = vmatpush1.msra.mxu0 0.0
    %98 = vmatprep.subr.mxu0 0.0
    %99 = vmatpush1.msra.mxu0 0.0
    %100 = vmatprep.subr.mxu0 0.0
    %101 = vmatpush1.msra.mxu0 0.0
    %102 = vmatprep.subr.mxu0 0.0
    %103 = vmatpush1.msra.mxu0 0.0
    %104 = vmatprep.subr.mxu0 0.0
    %105 = vmatpush1.msra.mxu0 0.0
    %106 = vmatprep.subr.mxu0 0.0
    %107 = vmatpush1.msra.mxu0 0.0
    %108 = vmatprep.subr.mxu0 0.0
    %109 = vmatpush1.msra.mxu0 0.0
    %110 = vmatprep.subr.mxu0 0.0
    %111 = vmatpush1.msra.mxu0 0.0
    %112 = vmatprep.subr.mxu0 0.0
    %113 = vmatpush1.msra.mxu0 0.0
    %114 = vmatprep.mubr.f32.mxu0 0.0
    %115 = vmatmul.mubr.f32.gmra.mrb[0].mxu0 %v35
    %v116 = vpop.f32.mrb[0].mxu0
    %v117 = vadd.f32 %v31, %v116
    %v118 = vpop.f32.mrb[0].mxu0
    %119 = vmatprep.mubr.f32.mxu0 0.0
    %120 = vmatmul.mubr.f32.gmra.mrb[0].mxu0 %v38
    %v121 = vpop.f32.mrb[0].mxu0
    %v122 = vadd.f32 %v31, %v121
    %v123 = vpop.f32.mrb[0].mxu0
    %124 = vmatprep.mubr.f32.mxu0 0.0
    %125 = vmatmul.mubr.f32.gmra.mrb[0].mxu0 %v41
    %v126 = vpop.f32.mrb[0].mxu0
    %v127 = vadd.f32 %v31, %v126
    %v128 = vpop.f32.mrb[0].mxu0
    %129 = vmatprep.mubr.f32.mxu0 0.0
    %130 = vmatmul.mubr.f32.gmra.mrb[0].mxu0 %v44
    %v131 = vpop.f32.mrb[0].mxu0
    %v132 = vadd.f32 %v31, %v131
    %v133 = vpop.f32.mrb[0].mxu0
    %134 = vdwg.mxu0
    %v135 = vmax.f32 %v117, 0.0
    %v136 = vmax.f32 %v122, 0.0
    %v137 = vmax.f32 %v127, 0.0
    %v138 = vmax.f32 %v132, 0.0
    %v139 = vld [vmem:[%s3] sm:$0xff]
    %v140 = vld [vmem:[%s3 + $0x8] sm:$0xff]
    %v141 = vld [vmem:[%s3 + $0x10] sm:$0xff]
    %v142 = vld [vmem:[%s3 + $0x18] sm:$0xff]
    %v143 = vld [vmem:[%s3 + $0x20] sm:$0xff]
    %v144 = vld [vmem:[%s3 + $0x28] sm:$0xff]
    %v145 = vld [vmem:[%s3 + $0x30] sm:$0xff]
    %v146 = vld [vmem:[%s3 + $0x38] sm:$0xff]
    %v147 = vld [vmem:[%s3 + $0x40] sm:$0xff]
    %v148 = vld [vmem:[%s3 + $0x48] sm:$0xff]
    %v149 = vld [vmem:[%s3 + $0x50] sm:$0xff]
    %v150 = vld [vmem:[%s3 + $0x58] sm:$0xff]
    %v151 = vld [vmem:[%s3 + $0x60] sm:$0xff]
    %v152 = vld [vmem:[%s3 + $0x68] sm:$0xff]
    %v153 = vld [vmem:[%s3 + $0x70] sm:$0xff]
    %v154 = vld [vmem:[%s3 + $0x78] sm:$0xff]
    %v155 = vld [vmem:[%s4] sm:$0x1]
    %v157 = vlaneseq
    %v158 = vshrl.u32 %v157, 7
    %v159 = vsub.s32 0, %v158
    %v160 = vrot.slane %v155, %v159
    %162 = vmatprep.subr.mxu0 0.0
    %163 = vmatpush1.msra.mxu0 %v139
    %164 = vmatprep.subr.mxu0 0.0
    %165 = vmatpush1.msra.mxu0 %v140
    %166 = vmatprep.subr.mxu0 0.0
    %167 = vmatpush1.msra.mxu0 %v141
    %168 = vmatprep.subr.mxu0 0.0
    %169 = vmatpush1.msra.mxu0 %v142
    %170 = vmatprep.subr.mxu0 0.0
    %171 = vmatpush1.msra.mxu0 %v143
    %172 = vmatprep.subr.mxu0 0.0
    %173 = vmatpush1.msra.mxu0 %v144
    %174 = vmatprep.subr.mxu0 0.0
    %175 = vmatpush1.msra.mxu0 %v145
    %176 = vmatprep.subr.mxu0 0.0
    %177 = vmatpush1.msra.mxu0 %v146
    %178 = vmatprep.subr.mxu0 0.0
    %179 = vmatpush1.msra.mxu0 %v147
    %180 = vmatprep.subr.mxu0 0.0
    %181 = vmatpush1.msra.mxu0 %v148
    %182 = vmatprep.subr.mxu0 0.0
    %183 = vmatpush1.msra.mxu0 %v149
    %184 = vmatprep.subr.mxu0 0.0
    %185 = vmatpush1.msra.mxu0 %v150
    %186 = vmatprep.subr.mxu0 0.0
    %187 = vmatpush1.msra.mxu0 %v151
    %188 = vmatprep.subr.mxu0 0.0
    %189 = vmatpush1.msra.mxu0 %v152
    %190 = vmatprep.subr.mxu0 0.0
    %191 = vmatpush1.msra.mxu0 %v153
    %192 = vmatprep.subr.mxu0 0.0
    %193 = vmatpush1.msra.mxu0 %v154
    %194 = vmatprep.subr.mxu0 0.0
    %195 = vmatpush1.msra.mxu0 0.0
    %196 = vmatprep.subr.mxu0 0.0
    %197 = vmatpush1.msra.mxu0 0.0
    %198 = vmatprep.subr.mxu0 0.0
    %199 = vmatpush1.msra.mxu0 0.0
    %200 = vmatprep.subr.mxu0 0.0
    %201 = vmatpush1.msra.mxu0 0.0
    %202 = vmatprep.subr.mxu0 0.0
    %203 = vmatpush1.msra.mxu0 0.0
    %204 = vmatprep.subr.mxu0 0.0
    %205 = vmatpush1.msra.mxu0 0.0
    %206 = vmatprep.subr.mxu0 0.0
    %207 = vmatpush1.msra.mxu0 0.0
    %208 = vmatprep.subr.mxu0 0.0
    %209 = vmatpush1.msra.mxu0 0.0
    %210 = vmatprep.subr.mxu0 0.0
    %211 = vmatpush1.msra.mxu0 0.0
    %212 = vmatprep.subr.mxu0 0.0
    %213 = vmatpush1.msra.mxu0 0.0
    %214 = vmatprep.subr.mxu0 0.0
    %215 = vmatpush1.msra.mxu0 0.0
    %216 = vmatprep.subr.mxu0 0.0
    %217 = vmatpush1.msra.mxu0 0.0
    %218 = vmatprep.subr.mxu0 0.0
    %219 = vmatpush1.msra.mxu0 0.0
    %220 = vmatprep.subr.mxu0 0.0
    %221 = vmatpush1.msra.mxu0 0.0
    %222 = vmatprep.subr.mxu0 0.0
    %223 = vmatpush1.msra.mxu0 0.0
    %224 = vmatprep.subr.mxu0 0.0
    %225 = vmatpush1.msra.mxu0 0.0
    %226 = vmatprep.mubr.f32.mxu0 0.0
    %227 = vmatmul.mubr.f32.gmra.mrb[0].mxu0 %v135
    %v228 = vpop.f32.mrb[0].mxu0
    %v229 = vadd.f32 %v160, %v228
    %v230 = vpop.f32.mrb[0].mxu0
    %231 = vmatprep.mubr.f32.mxu0 0.0
    %232 = vmatmul.mubr.f32.gmra.mrb[0].mxu0 %v136
    %v233 = vpop.f32.mrb[0].mxu0
    %v234 = vadd.f32 %v160, %v233
    %v235 = vpop.f32.mrb[0].mxu0
    %236 = vmatprep.mubr.f32.mxu0 0.0
    %237 = vmatmul.mubr.f32.gmra.mrb[0].mxu0 %v137
    %v238 = vpop.f32.mrb[0].mxu0
    %v239 = vadd.f32 %v160, %v238
    %v240 = vpop.f32.mrb[0].mxu0
    %241 = vmatprep.mubr.f32.mxu0 0.0
    %242 = vmatmul.mubr.f32.gmra.mrb[0].mxu0 %v138
    %v243 = vpop.f32.mrb[0].mxu0
    %v244 = vadd.f32 %v160, %v243
    %v245 = vpop.f32.mrb[0].mxu0
    %246 = vdwg.mxu0
    %vm247 = vcmp.ne.f32.partialorder %v21, 0.0
    %vm248 = vcmp.ne.f32.partialorder %v22, 0.0
    %vm249 = vcmp.ne.f32.partialorder %v23, 0.0
    %vm250 = vcmp.ne.f32.partialorder %v24, 0.0
    %v251 = vsel %vm247, 1, 0
    %v252 = vsel %vm248, 1, 0
    %v253 = vsel %vm249, 1, 0
    %v254 = vsel %vm250, 1, 0
    %255 = vset.pattern.permute.xlu0 5
    %256 = vperm.xlu0 %255, %v251
    %v257 = vpop.permute.xlu0 %256
    %258 = vset.pattern.permute.xlu0 5
    %259 = vperm.xlu0 %258, %v252
    %v260 = vpop.permute.xlu0 %259
    %261 = vset.pattern.permute.xlu0 5
    %262 = vperm.xlu0 %261, %v253
    %v263 = vpop.permute.xlu0 %262
    %264 = vset.pattern.permute.xlu0 5
    %265 = vperm.xlu0 %264, %v254
    %v266 = vpop.permute.xlu0 %265
    %vm267 = vcmp.eq.s32.totalorder %v257, 1
    %vm268 = vcmp.eq.s32.totalorder %v260, 1
    %vm269 = vcmp.eq.s32.totalorder %v263, 1
    %vm270 = vcmp.eq.s32.totalorder %v266, 1
    %275 = vrot.lane.b32.xlu0 %v229, 96
    %v276 = vpop.permute.xlu0 %275
    %277 = vrot.lane.b32.xlu0 %v234, 96
    %v278 = vpop.permute.xlu0 %277
    %279 = vrot.lane.b32.xlu0 %v239, 96
    %v280 = vpop.permute.xlu0 %279
    %281 = vrot.lane.b32.xlu0 %v244, 96
    %v282 = vpop.permute.xlu0 %281
    %v287 = vsel %vm267, %v229, %v276
    %v288 = vsel %vm268, %v234, %v278
    %v289 = vsel %vm269, %v239, %v280
    %v290 = vsel %vm270, %v244, %v282
    %vm291 = vcmask 261120
    %292 = vst.msk [vmem:[#allocation2] sm:$0xff] %vm291, %v287
    %293 = vst.msk [vmem:[#allocation2 + $0x8] sm:$0xff] %vm291, %v288
    %294 = vst.msk [vmem:[#allocation2 + $0x10] sm:$0xff] %vm291, %v289
    %295 = vst.msk [vmem:[#allocation2 + $0x18] sm:$0xff] %vm291, %v290
    // Predicated region
    $region22: #{tpu_custom_call.1} parent=1 // pred_check
      _
    $region23: #{tpu_custom_call.1} parent=1 // pred_check_branch
      %297 = sbr.rel (0) target = $region25
    $region24: #{tpu_custom_call.1} parent=1 // pred_region
      %s299 = ssub.s32 512, 512
      %300 = vsyncadd [#allocation3], %s299
      %s301 = sshll.u32 [#allocation2], 4
      %s302 = int_to_ptr.vmem [resolvable:$true] %s301
      %307 = dma.vmem_to_hbm [thread:$0]  %s302, 512, %s5, [#allocation3], 128, 128, 8
    $region25: #{tpu_custom_call.1} parent=1 // pred_fallthru
      _
    // Predicated region
    $region26: #{tpu_custom_call.1} parent=1 // pred_check
      _
    $region27: #{tpu_custom_call.1} parent=1 // pred_check_branch
      %309 = sbr.rel (0) target = $region29
    $region28: #{tpu_custom_call.1} parent=1 // pred_region
      %310 = dma.done [#allocation3], 512
    $region29: #{tpu_custom_call.1} parent=1 // pred_fallthru
      _
    %311 = vsyncpa [#allocation3], 1

</llo_original>
